<compile_context>
chip_gen: v5e
topology: v5e:2x2
jax: 0.10.0
libtpu: 0.0.40
codegen_flags: <defaults>
</compile_context>

<pallas_src>
import functools

import jax
import jax.numpy as jnp
from jax.experimental import pallas as pl
from jax.experimental.pallas import tpu as pltpu


def _round_up(v, m):
    return (v + m - 1) // m * m


# ----------------------------------------------------------------------------- kernel
def _fused_conv_kernel(x_ref, masks_ref, w1_ref, w2_ref, h_ref, y_ref, col_ref,
                       *, W, cin_p, cmid_p):
    """conv1(3x3,'same') + ReLU -> conv2(3x3,'same'), fused; one image per grid step.

    Layout (lane-dense): channels on sublanes, flattened H*W on lanes.
      x_ref    : (1, cin_p, L)           L = H*W (multiple of 128)
      masks_ref: (9, L) f32              grid-invariant tap-validity masks (host-hoisted)
      w1_ref   : (cmid_p, 8 + 9*cin_p)   bf16; column 0 carries the bias
      w2_ref   : (cout_p, 8 + 9*cmid_p)  bf16; column 0 carries the bias
      h_ref    : (1, cmid_p, L) f32      conv1+ReLU output == hooked layer's input
      y_ref    : (1, cout_p, L) f32      conv2 raw output  == hooked layer's output
      col_ref  : (8 + 9*max(cin_p,cmid_p), L) f32 scratch, reused by both convs
    """
    L = x_ref.shape[-1]
    K1 = 8 + 9 * cin_p
    K2 = 8 + 9 * cmid_p

    # Constant-1 "bias rows": weight column 0 holds the bias and columns 1..7 are zero, so
    # the values in rows 1..7 are irrelevant -> a single aligned full-tile store of ones.
    col_ref[pl.ds(0, 8), :] = jnp.ones((8, L), dtype=col_ref.dtype)

    def im2col(a, c_p):
        # a: (c_p, L) f32 value held in vregs.  Write the 9 rolled+masked taps straight
        # into the shared scratch (no jnp.concatenate copy pass).  Rolls use the XLU slot,
        # mask multiplies the VPU, so they co-issue with the MXU drain of the previous dot.
        for t in range(9):
            dh, dw = t // 3 - 1, t % 3 - 1
            shift = (-(dh * W + dw)) % L
            rolled = a if shift == 0 else pltpu.roll(a, shift=shift, axis=1)
            valid = masks_ref[pl.ds(t, 1), :]              # (1, L), broadcasts on sublanes
            col_ref[pl.ds(8 + t * c_p, c_p), :] = rolled * valid

    # conv1 + fused ReLU: one MXU matmul, bf16 operands / f32 accumulation (bias folded in).
    im2col(x_ref[0], cin_p)
    h = jnp.dot(w1_ref[...],
                col_ref[pl.ds(0, K1), :].astype(jnp.bfloat16),
                preferred_element_type=jnp.float32)
    h = jnp.maximum(h, 0.0)
    h_ref[0] = h.astype(h_ref.dtype)

    # conv2 (raw output at the hook point, no ReLU).  im2col consumes the in-register value
    # `h`; it never re-reads h_ref.
    im2col(h, cmid_p)
    y = jnp.dot(w2_ref[...],
                col_ref[pl.ds(0, K2), :].astype(jnp.bfloat16),
                preferred_element_type=jnp.float32)
    y_ref[0] = y.astype(y_ref.dtype)


# ----------------------------------------------------------------------------- wrapper
def _pack_weight_bias(w, b, cin_p, cout_p):
    """(Cout,Cin,3,3)+(Cout,) -> (cout_p, 8 + 9*cin_p) bf16.
    Column 0 carries the bias (pairs with the scratch's constant-1 rows); tap column layout
    is (kh*3+kw)*cin_p + cin, matching the kernel's im2col row layout."""
    cout, cin = w.shape[0], w.shape[1]
    w_p = jnp.pad(w, ((0, cout_p - cout), (0, cin_p - cin), (0, 0), (0, 0)))
    taps = jnp.transpose(w_p, (0, 2, 3, 1)).reshape(cout_p, 9 * cin_p)
    bias_block = jnp.zeros((cout_p, 8), jnp.float32).at[:, 0].set(
        jnp.pad(b, (0, cout_p - cout)))
    return jnp.concatenate([bias_block, taps], axis=1).astype(jnp.bfloat16)


def _tap_masks(H, W):
    """(9, H*W) f32 validity masks: zero-padding semantics, no wrap across rows/images."""
    pos = jnp.arange(H * W, dtype=jnp.int32)
    hi, wi = pos // W, pos % W
    rows = []
    for kh in range(3):
        for kw in range(3):
            dh, dw = kh - 1, kw - 1
            rows.append(((hi + dh >= 0) & (hi + dh < H)
                         & (wi + dw >= 0) & (wi + dw < W)).astype(jnp.float32))
    return jnp.stack(rows, axis=0)


@jax.jit
def fused_conv1_conv2(x, w1, b1, w2, b2):
    """conv1(3x3,'same')+ReLU then conv2(3x3,'same') in ONE pallas_call, grid = batch.

    x: (N, Cin, H, W) NCHW (PyTorch convention).  Returns (h, y): conv2's input and raw
    output, both NCHW float32.
    """
    N, Cin, H, W = x.shape
    Cmid, Cout = w1.shape[0], w2.shape[0]
    HW = H * W

    # Pad channel dims to multiples of 8 so every sublane tile is full (f32 tiling (8,128)).
    cin_p, cmid_p, cout_p = (_round_up(c, 8) for c in (Cin, Cmid, Cout))
    K1, K2 = 8 + 9 * cin_p, 8 + 9 * cmid_p

    # One image per block: channel pad + free reshape (no batch-interleave transpose);
    # per-block lane width L = H*W is bounded and lane-dense.
    xb = jnp.pad(x, ((0, 0), (0, cin_p - Cin), (0, 0), (0, 0))).reshape(N, cin_p, HW)
    masks = _tap_masks(H, W)
    w1m = _pack_weight_bias(w1, b1, cin_p, cmid_p)
    w2m = _pack_weight_bias(w2, b2, cmid_p, cout_p)

    kernel = functools.partial(_fused_conv_kernel, W=W, cin_p=cin_p, cmid_p=cmid_p)

    flops = 2 * (Cmid * 9 * Cin + Cout * 9 * Cmid) * N * H * W
    bytes_accessed = (4 * (xb.size + N * cmid_p * HW + N * cout_p * HW + masks.size)
                      + 2 * (w1m.size + w2m.size))

    # NOTE: per-block VMEM here is ~0.2 MiB (in/out blocks + 80KB scratch); if H*W or the
    # channel counts are scaled up, cap the per-block lane width and/or raise
    # vmem_limit_bytes (v5e scoped default is 16 MiB).
    h_b, y_b = pl.pallas_call(
        kernel,
        out_shape=(jax.ShapeDtypeStruct((N, cmid_p, HW), jnp.float32),
                   jax.ShapeDtypeStruct((N, cout_p, HW), jnp.float32)),
        grid_spec=pltpu.PrefetchScalarGridSpec(
            num_scalar_prefetch=0,
            grid=(N,),
            in_specs=[
                pl.BlockSpec((1, cin_p, HW), lambda g: (g, 0, 0)),
                pl.BlockSpec((9, HW), lambda g: (0, 0)),          # revisited: DMA'd once
                pl.BlockSpec((cmid_p, K1), lambda g: (0, 0)),
                pl.BlockSpec((cout_p, K2), lambda g: (0, 0)),
            ],
            out_specs=[
                pl.BlockSpec((1, cmid_p, HW), lambda g: (g, 0, 0)),
                pl.BlockSpec((1, cout_p, HW), lambda g: (g, 0, 0)),
            ],
            scratch_shapes=[pltpu.VMEM((8 + 9 * max(cin_p, cmid_p), HW), jnp.float32)],
        ),
        compiler_params=pltpu.CompilerParams(
            dimension_semantics=("parallel",),   # batch axis feeds both TensorCores on v7x
        ),
        cost_estimate=pl.CostEstimate(flops=flops, transcendentals=0,
                                      bytes_accessed=bytes_accessed),
    )(xb, masks, w1m, w2m)

    def unpack(o, c):
        return o.reshape(N, -1, H, W)[:, :c]     # free reshape + channel slice

    return unpack(h_b, Cmid), unpack(y_b, Cout)


# ------------------------------------------------------------------- synthetic submodule
class SmallConvNet:
    """Deterministic stand-in for the trained `submodule`: conv1 -> ReLU -> conv2 -> ReLU."""

    def __init__(self, cin=4, cmid=8, cout=8, key=None):
        if key is None:
            key = jax.random.PRNGKey(0)
        k1, k2, k3, k4 = jax.random.split(key, 4)
        self.params = {
            "conv1": {
                "weight": jax.random.normal(k1, (cmid, cin, 3, 3), jnp.float32) * 0.1,
                "bias": jax.random.normal(k2, (cmid,), jnp.float32) * 0.1,
            },
            "conv2": {
                "weight": jax.random.normal(k3, (cout, cmid, 3, 3), jnp.float32) * 0.1,
                "bias": jax.random.normal(k4, (cout,), jnp.float32) * 0.1,
            },
        }


# ------------------------------------------------------------------ hook-based extractor
class HookBasedFeatureExtractor:
    """JAX/Pallas equivalent of ivadomed's HookBasedFeatureExtractor.

    Runs the submodule forward (as one fused Pallas kernel), capturing the named layer's
    input tuple and output exactly as the PyTorch forward hooks would.
    """

    def __init__(self, submodule, layername, upscale=False):
        self.submodule = submodule
        self.layername = layername
        self.upscale = upscale  # TODO(synk): upscale (rescale to input size) is unused in the reference forward().
        self.inputs = None
        self.inputs_size = None
        self.outputs = None
        self.outputs_size = None

    def forward(self, x):
        assert self.layername == "conv2", "this extractor hooks the conv2 layer of SmallConvNet"
        p1 = self.submodule.params["conv1"]
        p2 = self.submodule.params["conv2"]

        # Single fused Pallas kernel: conv1+ReLU feeds conv2 through VMEM/vregs (no HBM
        # round trip).  `h` is exactly the hooked layer's input; `y` is its raw output.
        h, y = fused_conv1_conv2(x, p1["weight"], p1["bias"], p2["weight"], p2["bias"])

        # get_input_array: inputs = [i[k] for k in range(len(i))]  (hook input tuple of len 1)
        self.inputs = [h]
        self.inputs_size = [tuple(t.shape) for t in self.inputs]
        print("Input Array Size: ", self.inputs_size)

        # get_output_array: o is a Tensor, so iterating yields per-batch (C, H, W) slices.
        self.outputs = [y[b] for b in range(y.shape[0])]
        self.outputs_size = [tuple(t.shape) for t in self.outputs]
        print("Output Array Size: ", self.outputs_size)

        # The remainder of the submodule forward (trailing ReLU) produces a discarded result
        # in the reference (`self.submodule(x)`), so it is elided here (dead code).
        return (self.inputs, self.outputs)


# ---------------------------------------------------------------------- pure-JAX reference
def _conv3x3_ref(x, w, b, relu):
    y = jax.lax.conv_general_dilated(
        x, w, window_strides=(1, 1), padding=((1, 1), (1, 1)),
        dimension_numbers=("NCHW", "OIHW", "NCHW"),
        precision=jax.lax.Precision.HIGHEST)
    y = y + b.reshape(1, -1, 1, 1)
    return jnp.maximum(y, 0.0) if relu else y


# -------------------------------------------------------------------------------- main
if __name__ == "__main__":
    key = jax.random.PRNGKey(0)
    k_x, k_net = jax.random.split(key)

    # NCHW input, matching PyTorch conv conventions.
    x = jax.random.normal(k_x, (2, 4, 16, 16), jnp.float32)

    net = SmallConvNet(cin=4, cmid=8, cout=8, key=k_net)
    extractor = HookBasedFeatureExtractor(net, layername="conv2", upscale=False)

    inputs, outputs = extractor.forward(x)
    jax.block_until_ready(inputs)
    jax.block_until_ready(outputs)

    assert inputs[0].shape == (2, 8, 16, 16)
    assert len(outputs) == 2 and outputs[0].shape == (8, 16, 16)

    # Correctness against a pure-JAX reference (highest-precision lax.conv).  Tolerance is
    # set for bf16 MXU operands with f32 accumulation (observed abs error ~1e-2 worst case
    # at these magnitudes); real bugs (wrong tap/mask/bias) produce errors O(0.1-1).
    p1, p2 = net.params["conv1"], net.params["conv2"]
    h_ref = _conv3x3_ref(x, p1["weight"], p1["bias"], relu=True)
    y_ref = _conv3x3_ref(h_ref, p2["weight"], p2["bias"], relu=False)
    err_h = float(jnp.max(jnp.abs(inputs[0] - h_ref)))
    err_y = float(jnp.max(jnp.abs(jnp.stack(outputs, axis=0) - y_ref)))
    assert err_h < 3e-2 and err_y < 3e-2, (err_h, err_y)

    print("KERNEL_OK")
</pallas_src>

<mosaic_0001>
module attributes {stable_mosaic.version = 11 : i64} {
  func.func @_fused_conv_kernel(%arg0: i32, %arg1: memref<1x8x256xf32, #tpu.memory_space<vmem>>, %arg2: memref<9x256xf32, #tpu.memory_space<vmem>>, %arg3: memref<8x80xbf16, #tpu.memory_space<vmem>>, %arg4: memref<8x80xbf16, #tpu.memory_space<vmem>>, %arg5: memref<1x8x256xf32, #tpu.memory_space<vmem>>, %arg6: memref<1x8x256xf32, #tpu.memory_space<vmem>>, %arg7: memref<80x256xf32, #tpu.memory_space<vmem>>) attributes {dimension_semantics = [#tpu.dimension_semantics<parallel>], iteration_bounds = array<i64: 2>, scalar_prefetch = 0 : i64, scratch_operands = 1 : i64, tpu.core_type = #tpu.core_type<tc>, window_params = [{transform_indices = @transform_0, window_bounds = array<i64: 1, 8, 256>}, {pipeline_mode = #tpu.pipeline_mode<synchronous>, transform_indices = @transform_1, window_bounds = array<i64: 9, 256>}, {pipeline_mode = #tpu.pipeline_mode<synchronous>, transform_indices = @transform_2, window_bounds = array<i64: 8, 80>}, {pipeline_mode = #tpu.pipeline_mode<synchronous>, transform_indices = @transform_3, window_bounds = array<i64: 8, 80>}, {transform_indices = @transform_4, window_bounds = array<i64: 1, 8, 256>}, {transform_indices = @transform_5, window_bounds = array<i64: 1, 8, 256>}]} {
    %cst = arith.constant 1.000000e+00 : f32
    %0 = vector.broadcast %cst : f32 to vector<8x256xf32>
    %c0 = arith.constant 0 : index
    %c0_0 = arith.constant 0 : index
    %1 = vector.load %arg7[%c0, %c0_0] : memref<80x256xf32, #tpu.memory_space<vmem>>, vector<8x256xf32>
    tpu.vector_store %arg7[%c0, %c0_0], %0 {strides = array<i32>} : memref<80x256xf32, #tpu.memory_space<vmem>>, vector<8x256xf32>,
    %c0_1 = arith.constant 0 : index
    %c0_2 = arith.constant 0 : index
    %c0_3 = arith.constant 0 : index
    %2 = vector.load %arg1[%c0_1, %c0_2, %c0_3] : memref<1x8x256xf32, #tpu.memory_space<vmem>>, vector<1x8x256xf32>
    %3 = vector.shape_cast %2 : vector<1x8x256xf32> to vector<8x256xf32>
    %c17_i32 = arith.constant 17 : i32
    %4 = tpu.dynamic_rotate %3 by %c17_i32 dim 1 : vector<8x256xf32>, i32 -> vector<8x256xf32>
    %c0_4 = arith.constant 0 : index
    %c0_5 = arith.constant 0 : index
    %5 = vector.load %arg2[%c0_4, %c0_5] : memref<9x256xf32, #tpu.memory_space<vmem>>, vector<1x256xf32>
    %6 = vector.broadcast %5 : vector<1x256xf32> to vector<8x256xf32>
    %7 = arith.mulf %4, %6 : vector<8x256xf32>
    %c8 = arith.constant 8 : index
    %c0_6 = arith.constant 0 : index
    %8 = vector.load %arg7[%c8, %c0_6] : memref<80x256xf32, #tpu.memory_space<vmem>>, vector<8x256xf32>
    tpu.vector_store %arg7[%c8, %c0_6], %7 {strides = array<i32>} : memref<80x256xf32, #tpu.memory_space<vmem>>, vector<8x256xf32>,
    %c16_i32 = arith.constant 16 : i32
    %9 = tpu.dynamic_rotate %3 by %c16_i32 dim 1 : vector<8x256xf32>, i32 -> vector<8x256xf32>
    %c1 = arith.constant 1 : index
    %c0_7 = arith.constant 0 : index
    %10 = vector.load %arg2[%c1, %c0_7] : memref<9x256xf32, #tpu.memory_space<vmem>>, vector<1x256xf32>
    %11 = vector.broadcast %10 : vector<1x256xf32> to vector<8x256xf32>
    %12 = arith.mulf %9, %11 : vector<8x256xf32>
    %c16 = arith.constant 16 : index
    %c0_8 = arith.constant 0 : index
    %13 = vector.load %arg7[%c16, %c0_8] : memref<80x256xf32, #tpu.memory_space<vmem>>, vector<8x256xf32>
    tpu.vector_store %arg7[%c16, %c0_8], %12 {strides = array<i32>} : memref<80x256xf32, #tpu.memory_space<vmem>>, vector<8x256xf32>,
    %c15_i32 = arith.constant 15 : i32
    %14 = tpu.dynamic_rotate %3 by %c15_i32 dim 1 : vector<8x256xf32>, i32 -> vector<8x256xf32>
    %c2 = arith.constant 2 : index
    %c0_9 = arith.constant 0 : index
    %15 = vector.load %arg2[%c2, %c0_9] : memref<9x256xf32, #tpu.memory_space<vmem>>, vector<1x256xf32>
    %16 = vector.broadcast %15 : vector<1x256xf32> to vector<8x256xf32>
    %17 = arith.mulf %14, %16 : vector<8x256xf32>
    %c24 = arith.constant 24 : index
    %c0_10 = arith.constant 0 : index
    %18 = vector.load %arg7[%c24, %c0_10] : memref<80x256xf32, #tpu.memory_space<vmem>>, vector<8x256xf32>
    tpu.vector_store %arg7[%c24, %c0_10], %17 {strides = array<i32>} : memref<80x256xf32, #tpu.memory_space<vmem>>, vector<8x256xf32>,
    %c1_i32 = arith.constant 1 : i32
    %19 = tpu.dynamic_rotate %3 by %c1_i32 dim 1 : vector<8x256xf32>, i32 -> vector<8x256xf32>
    %c3 = arith.constant 3 : index
    %c0_11 = arith.constant 0 : index
    %20 = vector.load %arg2[%c3, %c0_11] : memref<9x256xf32, #tpu.memory_space<vmem>>, vector<1x256xf32>
    %21 = vector.broadcast %20 : vector<1x256xf32> to vector<8x256xf32>
    %22 = arith.mulf %19, %21 : vector<8x256xf32>
    %c32 = arith.constant 32 : index
    %c0_12 = arith.constant 0 : index
    %23 = vector.load %arg7[%c32, %c0_12] : memref<80x256xf32, #tpu.memory_space<vmem>>, vector<8x256xf32>
    tpu.vector_store %arg7[%c32, %c0_12], %22 {strides = array<i32>} : memref<80x256xf32, #tpu.memory_space<vmem>>, vector<8x256xf32>,
    %c4 = arith.constant 4 : index
    %c0_13 = arith.constant 0 : index
    %24 = vector.load %arg2[%c4, %c0_13] : memref<9x256xf32, #tpu.memory_space<vmem>>, vector<1x256xf32>
    %25 = vector.broadcast %24 : vector<1x256xf32> to vector<8x256xf32>
    %26 = arith.mulf %3, %25 : vector<8x256xf32>
    %c40 = arith.constant 40 : index
    %c0_14 = arith.constant 0 : index
    %27 = vector.load %arg7[%c40, %c0_14] : memref<80x256xf32, #tpu.memory_space<vmem>>, vector<8x256xf32>
    tpu.vector_store %arg7[%c40, %c0_14], %26 {strides = array<i32>} : memref<80x256xf32, #tpu.memory_space<vmem>>, vector<8x256xf32>,
    %c255_i32 = arith.constant 255 : i32
    %28 = tpu.dynamic_rotate %3 by %c255_i32 dim 1 : vector<8x256xf32>, i32 -> vector<8x256xf32>
    %c5 = arith.constant 5 : index
    %c0_15 = arith.constant 0 : index
    %29 = vector.load %arg2[%c5, %c0_15] : memref<9x256xf32, #tpu.memory_space<vmem>>, vector<1x256xf32>
    %30 = vector.broadcast %29 : vector<1x256xf32> to vector<8x256xf32>
    %31 = arith.mulf %28, %30 : vector<8x256xf32>
    %c48 = arith.constant 48 : index
    %c0_16 = arith.constant 0 : index
    %32 = vector.load %arg7[%c48, %c0_16] : memref<80x256xf32, #tpu.memory_space<vmem>>, vector<8x256xf32>
    tpu.vector_store %arg7[%c48, %c0_16], %31 {strides = array<i32>} : memref<80x256xf32, #tpu.memory_space<vmem>>, vector<8x256xf32>,
    %c241_i32 = arith.constant 241 : i32
    %33 = tpu.dynamic_rotate %3 by %c241_i32 dim 1 : vector<8x256xf32>, i32 -> vector<8x256xf32>
    %c6 = arith.constant 6 : index
    %c0_17 = arith.constant 0 : index
    %34 = vector.load %arg2[%c6, %c0_17] : memref<9x256xf32, #tpu.memory_space<vmem>>, vector<1x256xf32>
    %35 = vector.broadcast %34 : vector<1x256xf32> to vector<8x256xf32>
    %36 = arith.mulf %33, %35 : vector<8x256xf32>
    %c56 = arith.constant 56 : index
    %c0_18 = arith.constant 0 : index
    %37 = vector.load %arg7[%c56, %c0_18] : memref<80x256xf32, #tpu.memory_space<vmem>>, vector<8x256xf32>
    tpu.vector_store %arg7[%c56, %c0_18], %36 {strides = array<i32>} : memref<80x256xf32, #tpu.memory_space<vmem>>, vector<8x256xf32>,
    %c240_i32 = arith.constant 240 : i32
    %38 = tpu.dynamic_rotate %3 by %c240_i32 dim 1 : vector<8x256xf32>, i32 -> vector<8x256xf32>
    %c7 = arith.constant 7 : index
    %c0_19 = arith.constant 0 : index
    %39 = vector.load %arg2[%c7, %c0_19] : memref<9x256xf32, #tpu.memory_space<vmem>>, vector<1x256xf32>
    %40 = vector.broadcast %39 : vector<1x256xf32> to vector<8x256xf32>
    %41 = arith.mulf %38, %40 : vector<8x256xf32>
    %c64 = arith.constant 64 : index
    %c0_20 = arith.constant 0 : index
    %42 = vector.load %arg7[%c64, %c0_20] : memref<80x256xf32, #tpu.memory_space<vmem>>, vector<8x256xf32>
    tpu.vector_store %arg7[%c64, %c0_20], %41 {strides = array<i32>} : memref<80x256xf32, #tpu.memory_space<vmem>>, vector<8x256xf32>,
    %c239_i32 = arith.constant 239 : i32
    %43 = tpu.dynamic_rotate %3 by %c239_i32 dim 1 : vector<8x256xf32>, i32 -> vector<8x256xf32>
    %c8_21 = arith.constant 8 : index
    %c0_22 = arith.constant 0 : index
    %44 = vector.load %arg2[%c8_21, %c0_22] : memref<9x256xf32, #tpu.memory_space<vmem>>, vector<1x256xf32>
    %45 = vector.broadcast %44 : vector<1x256xf32> to vector<8x256xf32>
    %46 = arith.mulf %43, %45 : vector<8x256xf32>
    %c72 = arith.constant 72 : index
    %c0_23 = arith.constant 0 : index
    %47 = vector.load %arg7[%c72, %c0_23] : memref<80x256xf32, #tpu.memory_space<vmem>>, vector<8x256xf32>
    tpu.vector_store %arg7[%c72, %c0_23], %46 {strides = array<i32>} : memref<80x256xf32, #tpu.memory_space<vmem>>, vector<8x256xf32>,
    %c0_24 = arith.constant 0 : index
    %c0_25 = arith.constant 0 : index
    %48 = vector.load %arg3[%c0_24, %c0_25] : memref<8x80xbf16, #tpu.memory_space<vmem>>, vector<8x80xbf16>
    %c0_26 = arith.constant 0 : index
    %c0_27 = arith.constant 0 : index
    %49 = vector.load %arg7[%c0_26, %c0_27] : memref<80x256xf32, #tpu.memory_space<vmem>>, vector<80x256xf32>
    %50 = arith.truncf %49 : vector<80x256xf32> to vector<80x256xbf16>
    %cst_28 = arith.constant dense<0.000000e+00> : vector<8x256xf32>
    %51 = tpu.matmul %48, %50, %cst_28 {dimension_numbers = #tpu.dot_dimension_numbers<[1], [0], [0], [1], [0, 0, 1, 1], [], []>} : vector<8x80xbf16>, vector<80x256xbf16>, vector<8x256xf32> -> vector<8x256xf32>
    %cst_29 = arith.constant 0.000000e+00 : f32
    %52 = vector.broadcast %cst_29 : f32 to vector<8x256xf32>
    %53 = arith.maximumf %51, %52 : vector<8x256xf32>
    %c0_30 = arith.constant 0 : index
    %c0_31 = arith.constant 0 : index
    %c0_32 = arith.constant 0 : index
    %54 = vector.load %arg5[%c0_30, %c0_31, %c0_32] : memref<1x8x256xf32, #tpu.memory_space<vmem>>, vector<1x8x256xf32>
    %55 = vector.shape_cast %54 : vector<1x8x256xf32> to vector<8x256xf32>
    %56 = vector.shape_cast %53 : vector<8x256xf32> to vector<1x8x256xf32>
    tpu.vector_store %arg5[%c0_30, %c0_31, %c0_32], %56 {strides = array<i32>} : memref<1x8x256xf32, #tpu.memory_space<vmem>>, vector<1x8x256xf32>,
    %c17_i32_33 = arith.constant 17 : i32
    %57 = tpu.dynamic_rotate %53 by %c17_i32_33 dim 1 : vector<8x256xf32>, i32 -> vector<8x256xf32>
    %c0_34 = arith.constant 0 : index
    %c0_35 = arith.constant 0 : index
    %58 = vector.load %arg2[%c0_34, %c0_35] : memref<9x256xf32, #tpu.memory_space<vmem>>, vector<1x256xf32>
    %59 = vector.broadcast %58 : vector<1x256xf32> to vector<8x256xf32>
    %60 = arith.mulf %57, %59 : vector<8x256xf32>
    %c8_36 = arith.constant 8 : index
    %c0_37 = arith.constant 0 : index
    %61 = vector.load %arg7[%c8_36, %c0_37] : memref<80x256xf32, #tpu.memory_space<vmem>>, vector<8x256xf32>
    tpu.vector_store %arg7[%c8_36, %c0_37], %60 {strides = array<i32>} : memref<80x256xf32, #tpu.memory_space<vmem>>, vector<8x256xf32>,
    %c16_i32_38 = arith.constant 16 : i32
    %62 = tpu.dynamic_rotate %53 by %c16_i32_38 dim 1 : vector<8x256xf32>, i32 -> vector<8x256xf32>
    %c1_39 = arith.constant 1 : index
    %c0_40 = arith.constant 0 : index
    %63 = vector.load %arg2[%c1_39, %c0_40] : memref<9x256xf32, #tpu.memory_space<vmem>>, vector<1x256xf32>
    %64 = vector.broadcast %63 : vector<1x256xf32> to vector<8x256xf32>
    %65 = arith.mulf %62, %64 : vector<8x256xf32>
    %c16_41 = arith.constant 16 : index
    %c0_42 = arith.constant 0 : index
    %66 = vector.load %arg7[%c16_41, %c0_42] : memref<80x256xf32, #tpu.memory_space<vmem>>, vector<8x256xf32>
    tpu.vector_store %arg7[%c16_41, %c0_42], %65 {strides = array<i32>} : memref<80x256xf32, #tpu.memory_space<vmem>>, vector<8x256xf32>,
    %c15_i32_43 = arith.constant 15 : i32
    %67 = tpu.dynamic_rotate %53 by %c15_i32_43 dim 1 : vector<8x256xf32>, i32 -> vector<8x256xf32>
    %c2_44 = arith.constant 2 : index
    %c0_45 = arith.constant 0 : index
    %68 = vector.load %arg2[%c2_44, %c0_45] : memref<9x256xf32, #tpu.memory_space<vmem>>, vector<1x256xf32>
    %69 = vector.broadcast %68 : vector<1x256xf32> to vector<8x256xf32>
    %70 = arith.mulf %67, %69 : vector<8x256xf32>
    %c24_46 = arith.constant 24 : index
    %c0_47 = arith.constant 0 : index
    %71 = vector.load %arg7[%c24_46, %c0_47] : memref<80x256xf32, #tpu.memory_space<vmem>>, vector<8x256xf32>
    tpu.vector_store %arg7[%c24_46, %c0_47], %70 {strides = array<i32>} : memref<80x256xf32, #tpu.memory_space<vmem>>, vector<8x256xf32>,
    %c1_i32_48 = arith.constant 1 : i32
    %72 = tpu.dynamic_rotate %53 by %c1_i32_48 dim 1 : vector<8x256xf32>, i32 -> vector<8x256xf32>
    %c3_49 = arith.constant 3 : index
    %c0_50 = arith.constant 0 : index
    %73 = vector.load %arg2[%c3_49, %c0_50] : memref<9x256xf32, #tpu.memory_space<vmem>>, vector<1x256xf32>
    %74 = vector.broadcast %73 : vector<1x256xf32> to vector<8x256xf32>
    %75 = arith.mulf %72, %74 : vector<8x256xf32>
    %c32_51 = arith.constant 32 : index
    %c0_52 = arith.constant 0 : index
    %76 = vector.load %arg7[%c32_51, %c0_52] : memref<80x256xf32, #tpu.memory_space<vmem>>, vector<8x256xf32>
    tpu.vector_store %arg7[%c32_51, %c0_52], %75 {strides = array<i32>} : memref<80x256xf32, #tpu.memory_space<vmem>>, vector<8x256xf32>,
    %c4_53 = arith.constant 4 : index
    %c0_54 = arith.constant 0 : index
    %77 = vector.load %arg2[%c4_53, %c0_54] : memref<9x256xf32, #tpu.memory_space<vmem>>, vector<1x256xf32>
    %78 = vector.broadcast %77 : vector<1x256xf32> to vector<8x256xf32>
    %79 = arith.mulf %53, %78 : vector<8x256xf32>
    %c40_55 = arith.constant 40 : index
    %c0_56 = arith.constant 0 : index
    %80 = vector.load %arg7[%c40_55, %c0_56] : memref<80x256xf32, #tpu.memory_space<vmem>>, vector<8x256xf32>
    tpu.vector_store %arg7[%c40_55, %c0_56], %79 {strides = array<i32>} : memref<80x256xf32, #tpu.memory_space<vmem>>, vector<8x256xf32>,
    %c255_i32_57 = arith.constant 255 : i32
    %81 = tpu.dynamic_rotate %53 by %c255_i32_57 dim 1 : vector<8x256xf32>, i32 -> vector<8x256xf32>
    %c5_58 = arith.constant 5 : index
    %c0_59 = arith.constant 0 : index
    %82 = vector.load %arg2[%c5_58, %c0_59] : memref<9x256xf32, #tpu.memory_space<vmem>>, vector<1x256xf32>
    %83 = vector.broadcast %82 : vector<1x256xf32> to vector<8x256xf32>
    %84 = arith.mulf %81, %83 : vector<8x256xf32>
    %c48_60 = arith.constant 48 : index
    %c0_61 = arith.constant 0 : index
    %85 = vector.load %arg7[%c48_60, %c0_61] : memref<80x256xf32, #tpu.memory_space<vmem>>, vector<8x256xf32>
    tpu.vector_store %arg7[%c48_60, %c0_61], %84 {strides = array<i32>} : memref<80x256xf32, #tpu.memory_space<vmem>>, vector<8x256xf32>,
    %c241_i32_62 = arith.constant 241 : i32
    %86 = tpu.dynamic_rotate %53 by %c241_i32_62 dim 1 : vector<8x256xf32>, i32 -> vector<8x256xf32>
    %c6_63 = arith.constant 6 : index
    %c0_64 = arith.constant 0 : index
    %87 = vector.load %arg2[%c6_63, %c0_64] : memref<9x256xf32, #tpu.memory_space<vmem>>, vector<1x256xf32>
    %88 = vector.broadcast %87 : vector<1x256xf32> to vector<8x256xf32>
    %89 = arith.mulf %86, %88 : vector<8x256xf32>
    %c56_65 = arith.constant 56 : index
    %c0_66 = arith.constant 0 : index
    %90 = vector.load %arg7[%c56_65, %c0_66] : memref<80x256xf32, #tpu.memory_space<vmem>>, vector<8x256xf32>
    tpu.vector_store %arg7[%c56_65, %c0_66], %89 {strides = array<i32>} : memref<80x256xf32, #tpu.memory_space<vmem>>, vector<8x256xf32>,
    %c240_i32_67 = arith.constant 240 : i32
    %91 = tpu.dynamic_rotate %53 by %c240_i32_67 dim 1 : vector<8x256xf32>, i32 -> vector<8x256xf32>
    %c7_68 = arith.constant 7 : index
    %c0_69 = arith.constant 0 : index
    %92 = vector.load %arg2[%c7_68, %c0_69] : memref<9x256xf32, #tpu.memory_space<vmem>>, vector<1x256xf32>
    %93 = vector.broadcast %92 : vector<1x256xf32> to vector<8x256xf32>
    %94 = arith.mulf %91, %93 : vector<8x256xf32>
    %c64_70 = arith.constant 64 : index
    %c0_71 = arith.constant 0 : index
    %95 = vector.load %arg7[%c64_70, %c0_71] : memref<80x256xf32, #tpu.memory_space<vmem>>, vector<8x256xf32>
    tpu.vector_store %arg7[%c64_70, %c0_71], %94 {strides = array<i32>} : memref<80x256xf32, #tpu.memory_space<vmem>>, vector<8x256xf32>,
    %c239_i32_72 = arith.constant 239 : i32
    %96 = tpu.dynamic_rotate %53 by %c239_i32_72 dim 1 : vector<8x256xf32>, i32 -> vector<8x256xf32>
    %c8_73 = arith.constant 8 : index
    %c0_74 = arith.constant 0 : index
    %97 = vector.load %arg2[%c8_73, %c0_74] : memref<9x256xf32, #tpu.memory_space<vmem>>, vector<1x256xf32>
    %98 = vector.broadcast %97 : vector<1x256xf32> to vector<8x256xf32>
    %99 = arith.mulf %96, %98 : vector<8x256xf32>
    %c72_75 = arith.constant 72 : index
    %c0_76 = arith.constant 0 : index
    %100 = vector.load %arg7[%c72_75, %c0_76] : memref<80x256xf32, #tpu.memory_space<vmem>>, vector<8x256xf32>
    tpu.vector_store %arg7[%c72_75, %c0_76], %99 {strides = array<i32>} : memref<80x256xf32, #tpu.memory_space<vmem>>, vector<8x256xf32>,
    %c0_77 = arith.constant 0 : index
    %c0_78 = arith.constant 0 : index
    %101 = vector.load %arg4[%c0_77, %c0_78] : memref<8x80xbf16, #tpu.memory_space<vmem>>, vector<8x80xbf16>
    %c0_79 = arith.constant 0 : index
    %c0_80 = arith.constant 0 : index
    %102 = vector.load %arg7[%c0_79, %c0_80] : memref<80x256xf32, #tpu.memory_space<vmem>>, vector<80x256xf32>
    %103 = arith.truncf %102 : vector<80x256xf32> to vector<80x256xbf16>
    %cst_81 = arith.constant dense<0.000000e+00> : vector<8x256xf32>
    %104 = tpu.matmul %101, %103, %cst_81 {dimension_numbers = #tpu.dot_dimension_numbers<[1], [0], [0], [1], [0, 0, 1, 1], [], []>} : vector<8x80xbf16>, vector<80x256xbf16>, vector<8x256xf32> -> vector<8x256xf32>
    %c0_82 = arith.constant 0 : index
    %c0_83 = arith.constant 0 : index
    %c0_84 = arith.constant 0 : index
    %105 = vector.load %arg6[%c0_82, %c0_83, %c0_84] : memref<1x8x256xf32, #tpu.memory_space<vmem>>, vector<1x8x256xf32>
    %106 = vector.shape_cast %105 : vector<1x8x256xf32> to vector<8x256xf32>
    %107 = vector.shape_cast %104 : vector<8x256xf32> to vector<1x8x256xf32>
    tpu.vector_store %arg6[%c0_82, %c0_83, %c0_84], %107 {strides = array<i32>} : memref<1x8x256xf32, #tpu.memory_space<vmem>>, vector<1x8x256xf32>,
    return
  }
  func.func @transform_0(%arg0: i32) -> (i32, i32, i32) {
    %c0_i32 = arith.constant 0 : i32
    %c0_i32_0 = arith.constant 0 : i32
    %c0_i32_1 = arith.constant 0 : i32
    return %arg0, %c0_i32, %c0_i32_0 : i32, i32, i32
  }
  func.func @transform_1(%arg0: i32) -> (i32, i32) {
    %c0_i32 = arith.constant 0 : i32
    %c0_i32_0 = arith.constant 0 : i32
    %c0_i32_1 = arith.constant 0 : i32
    return %c0_i32, %c0_i32_0 : i32, i32
  }
  func.func @transform_2(%arg0: i32) -> (i32, i32) {
    %c0_i32 = arith.constant 0 : i32
    %c0_i32_0 = arith.constant 0 : i32
    %c0_i32_1 = arith.constant 0 : i32
    return %c0_i32, %c0_i32_0 : i32, i32
  }
  func.func @transform_3(%arg0: i32) -> (i32, i32) {
    %c0_i32 = arith.constant 0 : i32
    %c0_i32_0 = arith.constant 0 : i32
    %c0_i32_1 = arith.constant 0 : i32
    return %c0_i32, %c0_i32_0 : i32, i32
  }
  func.func @transform_4(%arg0: i32) -> (i32, i32, i32) {
    %c0_i32 = arith.constant 0 : i32
    %c0_i32_0 = arith.constant 0 : i32
    %c0_i32_1 = arith.constant 0 : i32
    return %arg0, %c0_i32, %c0_i32_0 : i32, i32, i32
  }
  func.func @transform_5(%arg0: i32) -> (i32, i32, i32) {
    %c0_i32 = arith.constant 0 : i32
    %c0_i32_0 = arith.constant 0 : i32
    %c0_i32_1 = arith.constant 0 : i32
    return %arg0, %c0_i32, %c0_i32_0 : i32, i32, i32
  }
}

</mosaic_0001>

<llo_original>
// kernel: fused_conv1_conv2.1
$region0: #{fused_conv1_conv2.1}
  #allocation0 [shape = 'u32[]', space=smem, size = 0x4, offset = 0x4, fixed_abs, tag = 'smem constant byte address 0x4 - core index']
  #allocation1 [shape = 'u32[72,128]{1,0:T(1,128)}', space=vmem, size = 0x9000, scoped, tag = 'internal scratch']
  #allocation2 [shape = 'f32[80,256]{1,0:T(8,128)}', space=vmem, size = 0x14000, scoped, tag = 'scratch operand']
  %s0 = inlined_call_operand.vmem [shape: f32[2,8,256], index: 0, kind: input, shape index: {}]
  %s1 = inlined_call_operand.vmem [shape: f32[9,256], index: 1, kind: input, shape index: {}]
  %s2 = inlined_call_operand.vmem [shape: bf16[8,80], index: 2, kind: input, shape index: {}]
  %s3 = inlined_call_operand.vmem [shape: bf16[8,80], index: 3, kind: input, shape index: {}]
  %s4 = inlined_call_operand.vmem [shape: f32[2,8,256], index: 4, kind: output, shape index: {0}]
  %s5 = inlined_call_operand.vmem [shape: f32[2,8,256], index: 5, kind: output, shape index: {1}]
  %6 = xla_tuple %s4, %s5
  %s7 = sld [smem:[#allocation0]]
  $region57: #{fused_conv1_conv2.1} parent=0
    _
  %s9 = ssub.s32 1, %s7
  %s10 = scalar_select 0, %s9, %s7
  loop: start=0, step=1, limit=4
  $region2: #{fused_conv1_conv2.1} parent=0 // loop_pre_header
    _
  $region3: #{fused_conv1_conv2.1} parent=0 // loop_header
    %s12 = sphi 0, %s16
    %p13 = scmp.ge.s32.totalorder %s12, 4
    %s22 = sphi 0, %s24
    %s25 = sphi 0, %s22
    %s26 = sphi 0, %s25
    %s42 = sphi 0, %s26
    %s46 = sphi 0, %s46
    %s48 = sphi 0, %s46
    %s49 = sphi 0, %s48
    %s63 = sphi 0, %s49
    %s67 = sphi 0, %s67
    %s69 = sphi 0, %s67
    %s70 = sphi 0, %s69
    %s84 = sphi 0, %s70
    %s88 = sphi 0, %s88
    %s90 = sphi 0, %s88
    %s91 = sphi 0, %s90
    %s105 = sphi 0, %s91
    %s111 = sphi 0, %s113
    %s114 = sphi 0, %s111
    %s115 = sphi 0, %s114
    %s131 = sphi 0, %s115
    %s137 = sphi 0, %s139
    %s140 = sphi 0, %s137
    %s141 = sphi 0, %s140
    %s157 = sphi 0, %s141
  $region4: #{fused_conv1_conv2.1} parent=0 // loop_header_branch
    %15 = sbr.rel (%p13) target = $region8
  $region5: #{fused_conv1_conv2.1} parent=0 // loop_body
    %s17 = ssub.s32 %s12, 1
    %s18 = ssub.s32 %s12, 2
    %s19 = sadd.s32 %s12, 1
    %s20 = ssub.s32 %s12, %s19
    %p21 = scmp.eq.s32.totalorder %s20, 0
    %s23 = sadd.s32 %s22, 1
    %s24 = scalar_select %p21, %s22, %s23
    %p27 = pneg %p21
    %p28 = scmp.eq.s32.totalorder %s12, 1
    %p29 = por %p27, %p28
    %p30 = scmp.ne.s32.totalorder %s22, %s25
    %p31 = scmp.eq.s32.totalorder %s12, 0
    %p32 = por %p30, %p31
    %p33 = scmp.ne.s32.totalorder %s22, %s25
    %p34 = scmp.eq.s32.totalorder %s17, 1
    %p35 = por %p33, %p34
    %p36 = scmp.ne.s32.totalorder %s25, %s26
    %p37 = scmp.eq.s32.totalorder %s17, 0
    %p38 = por %p36, %p37
    %p39 = scmp.ne.s32.totalorder %s25, %s26
    %p40 = scmp.eq.s32.totalorder %s18, 1
    %p41 = por %p39, %p40
    %p43 = scmp.ne.s32.totalorder %s26, %s42
    %p44 = scmp.eq.s32.totalorder %s18, 0
    %p45 = por %p43, %p44
    %s47 = sadd.s32 %s46, 1
    %p50 = scmp.eq.s32.totalorder %s12, 1
    %p51 = scmp.ne.s32.totalorder %s46, %s48
    %p52 = scmp.eq.s32.totalorder %s12, 0
    %p53 = por %p51, %p52
    %p54 = scmp.ne.s32.totalorder %s46, %s48
    %p55 = scmp.eq.s32.totalorder %s17, 1
    %p56 = por %p54, %p55
    %p57 = scmp.ne.s32.totalorder %s48, %s49
    %p58 = scmp.eq.s32.totalorder %s17, 0
    %p59 = por %p57, %p58
    %p60 = scmp.ne.s32.totalorder %s48, %s49
    %p61 = scmp.eq.s32.totalorder %s18, 1
    %p62 = por %p60, %p61
    %p64 = scmp.ne.s32.totalorder %s49, %s63
    %p65 = scmp.eq.s32.totalorder %s18, 0
    %p66 = por %p64, %p65
    %s68 = sadd.s32 %s67, 1
    %p71 = scmp.eq.s32.totalorder %s12, 1
    %p72 = scmp.ne.s32.totalorder %s67, %s69
    %p73 = scmp.eq.s32.totalorder %s12, 0
    %p74 = por %p72, %p73
    %p75 = scmp.ne.s32.totalorder %s67, %s69
    %p76 = scmp.eq.s32.totalorder %s17, 1
    %p77 = por %p75, %p76
    %p78 = scmp.ne.s32.totalorder %s69, %s70
    %p79 = scmp.eq.s32.totalorder %s17, 0
    %p80 = por %p78, %p79
    %p81 = scmp.ne.s32.totalorder %s69, %s70
    %p82 = scmp.eq.s32.totalorder %s18, 1
    %p83 = por %p81, %p82
    %p85 = scmp.ne.s32.totalorder %s70, %s84
    %p86 = scmp.eq.s32.totalorder %s18, 0
    %p87 = por %p85, %p86
    %s89 = sadd.s32 %s88, 1
    %p92 = scmp.eq.s32.totalorder %s12, 1
    %p93 = scmp.ne.s32.totalorder %s88, %s90
    %p94 = scmp.eq.s32.totalorder %s12, 0
    %p95 = por %p93, %p94
    %p96 = scmp.ne.s32.totalorder %s88, %s90
    %p97 = scmp.eq.s32.totalorder %s17, 1
    %p98 = por %p96, %p97
    %p99 = scmp.ne.s32.totalorder %s90, %s91
    %p100 = scmp.eq.s32.totalorder %s17, 0
    %p101 = por %p99, %p100
    %p102 = scmp.ne.s32.totalorder %s90, %s91
    %p103 = scmp.eq.s32.totalorder %s18, 1
    %p104 = por %p102, %p103
    %p106 = scmp.ne.s32.totalorder %s91, %s105
    %p107 = scmp.eq.s32.totalorder %s18, 0
    %p108 = por %p106, %p107
    %s109 = ssub.s32 %s12, %s19
    %p110 = scmp.eq.s32.totalorder %s109, 0
    %s112 = sadd.s32 %s111, 1
    %s113 = scalar_select %p110, %s111, %s112
    %p116 = pneg %p110
    %p117 = scmp.eq.s32.totalorder %s12, 1
    %p118 = por %p116, %p117
    %p119 = scmp.ne.s32.totalorder %s111, %s114
    %p120 = scmp.eq.s32.totalorder %s12, 0
    %p121 = por %p119, %p120
    %p122 = scmp.ne.s32.totalorder %s111, %s114
    %p123 = scmp.eq.s32.totalorder %s17, 1
    %p124 = por %p122, %p123
    %p125 = scmp.ne.s32.totalorder %s114, %s115
    %p126 = scmp.eq.s32.totalorder %s17, 0
    %p127 = por %p125, %p126
    %p128 = scmp.ne.s32.totalorder %s114, %s115
    %p129 = scmp.eq.s32.totalorder %s18, 1
    %p130 = por %p128, %p129
    %p132 = scmp.ne.s32.totalorder %s115, %s131
    %p133 = scmp.eq.s32.totalorder %s18, 0
    %p134 = por %p132, %p133
    %s135 = ssub.s32 %s12, %s19
    %p136 = scmp.eq.s32.totalorder %s135, 0
    %s138 = sadd.s32 %s137, 1
    %s139 = scalar_select %p136, %s137, %s138
    %p142 = pneg %p136
    %p143 = scmp.eq.s32.totalorder %s12, 1
    %p144 = por %p142, %p143
    %p145 = scmp.ne.s32.totalorder %s137, %s140
    %p146 = scmp.eq.s32.totalorder %s12, 0
    %p147 = por %p145, %p146
    %p148 = scmp.ne.s32.totalorder %s137, %s140
    %p149 = scmp.eq.s32.totalorder %s17, 1
    %p150 = por %p148, %p149
    %p151 = scmp.ne.s32.totalorder %s140, %s141
    %p152 = scmp.eq.s32.totalorder %s17, 0
    %p153 = por %p151, %p152
    %p154 = scmp.ne.s32.totalorder %s140, %s141
    %p155 = scmp.eq.s32.totalorder %s18, 1
    %p156 = por %p154, %p155
    %p158 = scmp.ne.s32.totalorder %s141, %s157
    %p159 = scmp.eq.s32.totalorder %s18, 0
    %p160 = por %p158, %p159
    %p161 = scmp.le.s32.totalorder 1, %s12
    %p162 = scmp.lt.s32.totalorder %s12, 3
    %p163 = pnand %p161, %p162
    %p164 = pneg %p163
    // Predicated region
    $region9: #{fused_conv1_conv2.1} parent=5 // pred_check
      _
    $region10: #{fused_conv1_conv2.1} parent=5 // pred_check_branch
      %166 = sbr.rel (%p163) target = $region12
    $region11: #{fused_conv1_conv2.1} parent=5 // pred_region
      %s167 = ssub.s32 %s12, 1
      // Predicated region
      $region13: #{fused_conv1_conv2.1} parent=11 // pred_check
        %p168 = pneg %p59
      $region14: #{fused_conv1_conv2.1} parent=11 // pred_check_branch
        %170 = sbr.rel (%p168) target = $region16
      $region15: #{fused_conv1_conv2.1} parent=11 // pred_region
        _
      $region16: #{fused_conv1_conv2.1} parent=11 // pred_fallthru
        _
      // Predicated region
      $region17: #{fused_conv1_conv2.1} parent=11 // pred_check
        %p171 = pneg %p80
      $region18: #{fused_conv1_conv2.1} parent=11 // pred_check_branch
        %173 = sbr.rel (%p171) target = $region20
      $region19: #{fused_conv1_conv2.1} parent=11 // pred_region
        _
      $region20: #{fused_conv1_conv2.1} parent=11 // pred_fallthru
        _
      // Predicated region
      $region21: #{fused_conv1_conv2.1} parent=11 // pred_check
        %p174 = pneg %p101
      $region22: #{fused_conv1_conv2.1} parent=11 // pred_check_branch
        %176 = sbr.rel (%p174) target = $region24
      $region23: #{fused_conv1_conv2.1} parent=11 // pred_region
        _
      $region24: #{fused_conv1_conv2.1} parent=11 // pred_fallthru
        _
    $region12: #{fused_conv1_conv2.1} parent=5 // pred_fallthru
      _
    %p177 = scmp.lt.s32.totalorder %s12, 2
    // Predicated region
    $region25: #{fused_conv1_conv2.1} parent=5 // pred_check
      %p178 = pneg %p177
    $region26: #{fused_conv1_conv2.1} parent=5 // pred_check_branch
      %180 = sbr.rel (%p178) target = $region28
    $region27: #{fused_conv1_conv2.1} parent=5 // pred_region
      // Predicated region
      $region29: #{fused_conv1_conv2.1} parent=27 // pred_check
        %p181 = pneg %p32
      $region30: #{fused_conv1_conv2.1} parent=27 // pred_check_branch
        %183 = sbr.rel (%p181) target = $region32
      $region31: #{fused_conv1_conv2.1} parent=27 // pred_region
        %p184 = scmp.lt.s32.totalorder %s12, 1
        %s185 = scalar_select %p184, %s12, 1
        %s186 = smul.addr %s185, 2
        %s187 = smul.addr %s186, 8
        %s188 = scalar_lea.vmem %s0, %s187
      $region32: #{fused_conv1_conv2.1} parent=27 // pred_fallthru
        _
    $region28: #{fused_conv1_conv2.1} parent=5 // pred_fallthru
      _
    %p189 = scmp.le.s32.totalorder 1, %s12
    %p190 = scmp.lt.s32.totalorder %s12, 3
    %p191 = pnand %p189, %p190
    %p192 = pneg %p191
    // Predicated region
    $region33: #{fused_conv1_conv2.1} parent=5 // pred_check
      _
    $region34: #{fused_conv1_conv2.1} parent=5 // pred_check_branch
      %194 = sbr.rel (%p191) target = $region36
    $region35: #{fused_conv1_conv2.1} parent=5 // pred_region
      %s195 = ssub.s32 %s12, 1
      %p196 = scmp.lt.s32.totalorder %s17, 1
      %s197 = scalar_select %p196, %s17, 1
      %s198 = smul.addr %s197, 2
      %s199 = smul.addr %s198, 8
      %s200 = scalar_lea.vmem %s0, %s199
      %p201 = pneg %p38
      %p202 = pneg %p35
      %p203 = pneg %p59
      %p204 = pneg %p56
      %p205 = pneg %p80
      %p206 = pneg %p77
      %p207 = pneg %p101
      %p208 = pneg %p98
      %p209 = pneg %p127
      %p210 = pneg %p124
      %p211 = scmp.lt.s32.totalorder %s17, 1
      %s212 = scalar_select %p211, %s17, 1
      %s213 = smul.addr %s212, 2
      %s214 = smul.addr %s213, 8
      %s215 = scalar_lea.vmem %s4, %s214
      %p216 = pneg %p153
      %p217 = pneg %p150
      %p218 = scmp.lt.s32.totalorder %s17, 1
      %s219 = scalar_select %p218, %s17, 1
      %s220 = smul.addr %s219, 2
      %s221 = smul.addr %s220, 8
      %s222 = scalar_lea.vmem %s5, %s221
      %p223 = scmp.lt.s32.totalorder %s17, 1
      %s224 = scalar_select %p223, %s17, 1
      %s225 = smul.addr %s224, 2
      %s226 = smul.addr %s225, 8
      %s227 = scalar_lea.vmem %s0, %s226
      %p228 = scmp.lt.s32.totalorder %s17, 1
      %s229 = scalar_select %p228, %s17, 1
      %s230 = smul.addr %s229, 2
      %s231 = smul.addr %s230, 8
      %s232 = scalar_lea.vmem %s4, %s231
      %p233 = scmp.lt.s32.totalorder %s17, 1
      %s234 = scalar_select %p233, %s17, 1
      %s235 = smul.addr %s234, 2
      %s236 = smul.addr %s235, 8
      %s237 = scalar_lea.vmem %s5, %s236
      %239 = vst [vmem:[#allocation2] sm:$0xff] 1.0
      %240 = vst [vmem:[#allocation2 + $0x8] sm:$0xff] 1.0
      %v241 = vld [vmem:[%s227] sm:$0xff]
      %v242 = vld [vmem:[%s227 + $0x8] sm:$0xff]
      %243 = vrot.lane.b32.xlu0 %v241, 17
      %v244 = vpop.permute.xlu0 %243
      %245 = vrot.lane.b32.xlu0 %v242, 17
      %v246 = vpop.permute.xlu0 %245
      %v247 = vlaneseq
      %v248 = vand.u32 %v247, 127
      %vm249 = vcmp.lt.s32.totalorder %v248, 17
      %v250 = vsel %vm249, %v244, %v246
      %v251 = vsel %vm249, %v246, %v244
      %v252 = vld [vmem:[%s1] ss:$8 sm:$0x3]
      %v254 = vperm.slane %v252, 0
      %v255 = vperm.slane %v252, 1
      %v258 = vmul.f32 %v251, %v254
      %v259 = vmul.f32 %v250, %v255
      %260 = vst [vmem:[#allocation2 + $0x10] sm:$0xff] %v258
      %261 = vst [vmem:[#allocation2 + $0x18] sm:$0xff] %v259
      %262 = vrot.lane.b32.xlu0 %v241, 16
      %v263 = vpop.permute.xlu0 %262
      %264 = vrot.lane.b32.xlu0 %v242, 16
      %v265 = vpop.permute.xlu0 %264
      %vm266 = vcmp.lt.s32.totalorder %v248, 16
      %v267 = vsel %vm266, %v263, %v265
      %v268 = vsel %vm266, %v265, %v263
      %s269 = scalar_lea.vmem %s1, 1
      %v270 = vld [vmem:[%s269] ss:$8 sm:$0x3]
      %v272 = vperm.slane %v270, 0
      %v273 = vperm.slane %v270, 1
      %v276 = vmul.f32 %v268, %v272
      %v277 = vmul.f32 %v267, %v273
      %278 = vst [vmem:[#allocation2 + $0x20] sm:$0xff] %v276
      %279 = vst [vmem:[#allocation2 + $0x28] sm:$0xff] %v277
      %280 = vrot.lane.b32.xlu0 %v241, 15
      %v281 = vpop.permute.xlu0 %280
      %282 = vrot.lane.b32.xlu0 %v242, 15
      %v283 = vpop.permute.xlu0 %282
      %vm284 = vcmp.lt.s32.totalorder %v248, 15
      %v285 = vsel %vm284, %v281, %v283
      %v286 = vsel %vm284, %v283, %v281
      %s287 = scalar_lea.vmem %s1, 2
      %v288 = vld [vmem:[%s287] ss:$8 sm:$0x3]
      %v290 = vperm.slane %v288, 0
      %v291 = vperm.slane %v288, 1
      %v294 = vmul.f32 %v286, %v290
      %v295 = vmul.f32 %v285, %v291
      %296 = vst [vmem:[#allocation2 + $0x30] sm:$0xff] %v294
      %297 = vst [vmem:[#allocation2 + $0x38] sm:$0xff] %v295
      %298 = vrot.lane.b32.xlu0 %v241, 1
      %v299 = vpop.permute.xlu0 %298
      %300 = vrot.lane.b32.xlu0 %v242, 1
      %v301 = vpop.permute.xlu0 %300
      %vm302 = vcmp.lt.s32.totalorder %v248, 1
      %v303 = vsel %vm302, %v299, %v301
      %v304 = vsel %vm302, %v301, %v299
      %s305 = scalar_lea.vmem %s1, 3
      %v306 = vld [vmem:[%s305] ss:$8 sm:$0x3]
      %v308 = vperm.slane %v306, 0
      %v309 = vperm.slane %v306, 1
      %v312 = vmul.f32 %v304, %v308
      %v313 = vmul.f32 %v303, %v309
      %314 = vst [vmem:[#allocation2 + $0x40] sm:$0xff] %v312
      %315 = vst [vmem:[#allocation2 + $0x48] sm:$0xff] %v313
      %s316 = scalar_lea.vmem %s1, 4
      %v317 = vld [vmem:[%s316] ss:$8 sm:$0x3]
      %v319 = vperm.slane %v317, 0
      %v320 = vperm.slane %v317, 1
      %v323 = vmul.f32 %v241, %v319
      %v324 = vmul.f32 %v242, %v320
      %325 = vst [vmem:[#allocation2 + $0x50] sm:$0xff] %v323
      %326 = vst [vmem:[#allocation2 + $0x58] sm:$0xff] %v324
      %327 = vrot.lane.b32.xlu0 %v241, 127
      %v328 = vpop.permute.xlu0 %327
      %329 = vrot.lane.b32.xlu0 %v242, 127
      %v330 = vpop.permute.xlu0 %329
      %vm331 = vcmp.lt.s32.totalorder %v248, 127
      %v332 = vsel %vm331, %v328, %v330
      %v333 = vsel %vm331, %v330, %v328
      %s334 = scalar_lea.vmem %s1, 5
      %v335 = vld [vmem:[%s334] ss:$8 sm:$0x3]
      %v337 = vperm.slane %v335, 0
      %v338 = vperm.slane %v335, 1
      %v341 = vmul.f32 %v332, %v337
      %v342 = vmul.f32 %v333, %v338
      %343 = vst [vmem:[#allocation2 + $0x60] sm:$0xff] %v341
      %344 = vst [vmem:[#allocation2 + $0x68] sm:$0xff] %v342
      %345 = vrot.lane.b32.xlu0 %v241, 113
      %v346 = vpop.permute.xlu0 %345
      %347 = vrot.lane.b32.xlu0 %v242, 113
      %v348 = vpop.permute.xlu0 %347
      %vm349 = vcmp.lt.s32.totalorder %v248, 113
      %v350 = vsel %vm349, %v346, %v348
      %v351 = vsel %vm349, %v348, %v346
      %s352 = scalar_lea.vmem %s1, 6
      %v353 = vld [vmem:[%s352] ss:$8 sm:$0x3]
      %v355 = vperm.slane %v353, 0
      %v356 = vperm.slane %v353, 1
      %v359 = vmul.f32 %v350, %v355
      %v360 = vmul.f32 %v351, %v356
      %361 = vst [vmem:[#allocation2 + $0x70] sm:$0xff] %v359
      %362 = vst [vmem:[#allocation2 + $0x78] sm:$0xff] %v360
      %363 = vrot.lane.b32.xlu0 %v241, 112
      %v364 = vpop.permute.xlu0 %363
      %365 = vrot.lane.b32.xlu0 %v242, 112
      %v366 = vpop.permute.xlu0 %365
      %vm367 = vcmp.lt.s32.totalorder %v248, 112
      %v368 = vsel %vm367, %v364, %v366
      %v369 = vsel %vm367, %v366, %v364
      %s370 = scalar_lea.vmem %s1, 7
      %v371 = vld [vmem:[%s370] ss:$8 sm:$0x3]
      %v373 = vperm.slane %v371, 0
      %v374 = vperm.slane %v371, 1
      %v377 = vmul.f32 %v368, %v373
      %v378 = vmul.f32 %v369, %v374
      %379 = vst [vmem:[#allocation2 + $0x80] sm:$0xff] %v377
      %380 = vst [vmem:[#allocation2 + $0x88] sm:$0xff] %v378
      %381 = vrot.lane.b32.xlu0 %v241, 111
      %v382 = vpop.permute.xlu0 %381
      %383 = vrot.lane.b32.xlu0 %v242, 111
      %v384 = vpop.permute.xlu0 %383
      %vm385 = vcmp.lt.s32.totalorder %v248, 111
      %v386 = vsel %vm385, %v382, %v384
      %v387 = vsel %vm385, %v384, %v382
      %s388 = scalar_lea.vmem %s1, 16
      %v389 = vld [vmem:[%s388] ss:$8 sm:$0x3]
      %v391 = vperm.slane %v389, 0
      %v392 = vperm.slane %v389, 1
      %v395 = vmul.f32 %v386, %v391
      %v396 = vmul.f32 %v387, %v392
      %397 = vst [vmem:[#allocation2 + $0x90] sm:$0xff] %v395
      %398 = vst [vmem:[#allocation2 + $0x98] sm:$0xff] %v396
      %v399 = vld [vmem:[%s2] sm:$0xf]
      %v400 = vld [vmem:[#allocation2] sm:$0xff]
      %v401 = vld [vmem:[#allocation2 + $0x8] sm:$0xff]
      %v402 = vld [vmem:[#allocation2 + $0x10] sm:$0xff]
      %v403 = vld [vmem:[#allocation2 + $0x18] sm:$0xff]
      %v404 = vld [vmem:[#allocation2 + $0x20] sm:$0xff]
      %v405 = vld [vmem:[#allocation2 + $0x28] sm:$0xff]
      %v406 = vld [vmem:[#allocation2 + $0x30] sm:$0xff]
      %v407 = vld [vmem:[#allocation2 + $0x38] sm:$0xff]
      %v408 = vld [vmem:[#allocation2 + $0x40] sm:$0xff]
      %v409 = vld [vmem:[#allocation2 + $0x48] sm:$0xff]
      %v410 = vld [vmem:[#allocation2 + $0x50] sm:$0xff]
      %v411 = vld [vmem:[#allocation2 + $0x58] sm:$0xff]
      %v412 = vld [vmem:[#allocation2 + $0x60] sm:$0xff]
      %v413 = vld [vmem:[#allocation2 + $0x68] sm:$0xff]
      %v414 = vld [vmem:[#allocation2 + $0x70] sm:$0xff]
      %v415 = vld [vmem:[#allocation2 + $0x78] sm:$0xff]
      %v416 = vld [vmem:[#allocation2 + $0x80] sm:$0xff]
      %v417 = vld [vmem:[#allocation2 + $0x88] sm:$0xff]
      %v418 = vld [vmem:[#allocation2 + $0x90] sm:$0xff]
      %v419 = vld [vmem:[#allocation2 + $0x98] sm:$0xff]
      %v420 = vpack.c.bf16 %v402, %v400
      %v421 = vpack.c.bf16 %v403, %v401
      %v422 = vpack.c.bf16 %v406, %v404
      %v423 = vpack.c.bf16 %v407, %v405
      %v424 = vpack.c.bf16 %v410, %v408
      %v425 = vpack.c.bf16 %v411, %v409
      %v426 = vpack.c.bf16 %v414, %v412
      %v427 = vpack.c.bf16 %v415, %v413
      %v428 = vpack.c.bf16 %v418, %v416
      %v429 = vpack.c.bf16 %v419, %v417
      %vm430 = vcmask 654336
      %v432 = vsel %vm430, %v399, 0
      %434 = vmatpush.bf16.msra.mxu0 0
      %435 = vmatpush.bf16.msra.mxu0 0
      %436 = vmatpush.bf16.msra.mxu0 0
      %437 = vmatpush.bf16.msra.mxu0 %v428
      %438 = vmatpush.bf16.msra.mxu0 %v426
      %439 = vmatpush.bf16.msra.mxu0 %v424
      %440 = vmatpush.bf16.msra.mxu0 %v422
      %441 = vmatpush.bf16.msra.mxu0 %v420
      %442 = vmatmul.bf16.gmra.mxu0 %v432
      %v443 = vpop.f32.mrf.mxu0
      %v444 = vadd.f32 0.0, %v443
      %v445 = vpop.f32.mrf.mxu0
      %446 = vdwg.mxu0
      %447 = vmatpush.bf16.msra.mxu0 0
      %448 = vmatpush.bf16.msra.mxu0 0
      %449 = vmatpush.bf16.msra.mxu0 0
      %450 = vmatpush.bf16.msra.mxu0 %v429
      %451 = vmatpush.bf16.msra.mxu0 %v427
      %452 = vmatpush.bf16.msra.mxu0 %v425
      %453 = vmatpush.bf16.msra.mxu0 %v423
      %454 = vmatpush.bf16.msra.mxu0 %v421
      %455 = vmatmul.bf16.gmra.mxu0 %v432
      %v456 = vpop.f32.mrf.mxu0
      %v457 = vadd.f32 0.0, %v456
      %v458 = vpop.f32.mrf.mxu0
      %459 = vdwg.mxu0
      %v460 = vmax.f32 %v444, 0.0
      %v461 = vmax.f32 %v457, 0.0
      %462 = vst [vmem:[%s232] sm:$0xff] %v460
      %463 = vst [vmem:[%s232 + $0x8] sm:$0xff] %v461
      %464 = vrot.lane.b32.xlu0 %v460, 17
      %v465 = vpop.permute.xlu0 %464
      %466 = vrot.lane.b32.xlu0 %v461, 17
      %v467 = vpop.permute.xlu0 %466
      %v468 = vsel %vm249, %v465, %v467
      %v469 = vsel %vm249, %v467, %v465
      %v470 = vld [vmem:[%s1] ss:$8 sm:$0x3]
      %v472 = vperm.slane %v470, 0
      %v473 = vperm.slane %v470, 1
      %v476 = vmul.f32 %v469, %v472
      %v477 = vmul.f32 %v468, %v473
      %478 = vst [vmem:[#allocation2 + $0x10] sm:$0xff] %v476
      %479 = vst [vmem:[#allocation2 + $0x18] sm:$0xff] %v477
      %480 = vrot.lane.b32.xlu0 %v460, 16
      %v481 = vpop.permute.xlu0 %480
      %482 = vrot.lane.b32.xlu0 %v461, 16
      %v483 = vpop.permute.xlu0 %482
      %v484 = vsel %vm266, %v481, %v483
      %v485 = vsel %vm266, %v483, %v481
      %v486 = vld [vmem:[%s269] ss:$8 sm:$0x3]
      %v488 = vperm.slane %v486, 0
      %v489 = vperm.slane %v486, 1
      %v492 = vmul.f32 %v485, %v488
      %v493 = vmul.f32 %v484, %v489
      %494 = vst [vmem:[#allocation2 + $0x20] sm:$0xff] %v492
      %495 = vst [vmem:[#allocation2 + $0x28] sm:$0xff] %v493
      %496 = vrot.lane.b32.xlu0 %v460, 15
      %v497 = vpop.permute.xlu0 %496
      %498 = vrot.lane.b32.xlu0 %v461, 15
      %v499 = vpop.permute.xlu0 %498
      %v500 = vsel %vm284, %v497, %v499
      %v501 = vsel %vm284, %v499, %v497
      %v502 = vld [vmem:[%s287] ss:$8 sm:$0x3]
      %v504 = vperm.slane %v502, 0
      %v505 = vperm.slane %v502, 1
      %v508 = vmul.f32 %v501, %v504
      %v509 = vmul.f32 %v500, %v505
      %510 = vst [vmem:[#allocation2 + $0x30] sm:$0xff] %v508
      %511 = vst [vmem:[#allocation2 + $0x38] sm:$0xff] %v509
      %512 = vrot.lane.b32.xlu0 %v460, 1
      %v513 = vpop.permute.xlu0 %512
      %514 = vrot.lane.b32.xlu0 %v461, 1
      %v515 = vpop.permute.xlu0 %514
      %v516 = vsel %vm302, %v513, %v515
      %v517 = vsel %vm302, %v515, %v513
      %v518 = vld [vmem:[%s305] ss:$8 sm:$0x3]
      %v520 = vperm.slane %v518, 0
      %v521 = vperm.slane %v518, 1
      %v524 = vmul.f32 %v517, %v520
      %v525 = vmul.f32 %v516, %v521
      %526 = vst [vmem:[#allocation2 + $0x40] sm:$0xff] %v524
      %527 = vst [vmem:[#allocation2 + $0x48] sm:$0xff] %v525
      %v528 = vld [vmem:[%s316] ss:$8 sm:$0x3]
      %v530 = vperm.slane %v528, 0
      %v531 = vperm.slane %v528, 1
      %v534 = vmul.f32 %v460, %v530
      %v535 = vmul.f32 %v461, %v531
      %536 = vst [vmem:[#allocation2 + $0x50] sm:$0xff] %v534
      %537 = vst [vmem:[#allocation2 + $0x58] sm:$0xff] %v535
      %538 = vrot.lane.b32.xlu0 %v460, 127
      %v539 = vpop.permute.xlu0 %538
      %540 = vrot.lane.b32.xlu0 %v461, 127
      %v541 = vpop.permute.xlu0 %540
      %v542 = vsel %vm331, %v539, %v541
      %v543 = vsel %vm331, %v541, %v539
      %v544 = vld [vmem:[%s334] ss:$8 sm:$0x3]
      %v546 = vperm.slane %v544, 0
      %v547 = vperm.slane %v544, 1
      %v550 = vmul.f32 %v542, %v546
      %v551 = vmul.f32 %v543, %v547
      %552 = vst [vmem:[#allocation2 + $0x60] sm:$0xff] %v550
      %553 = vst [vmem:[#allocation2 + $0x68] sm:$0xff] %v551
      %554 = vrot.lane.b32.xlu0 %v460, 113
      %v555 = vpop.permute.xlu0 %554
      %556 = vrot.lane.b32.xlu0 %v461, 113
      %v557 = vpop.permute.xlu0 %556
      %v558 = vsel %vm349, %v555, %v557
      %v559 = vsel %vm349, %v557, %v555
      %v560 = vld [vmem:[%s352] ss:$8 sm:$0x3]
      %v562 = vperm.slane %v560, 0
      %v563 = vperm.slane %v560, 1
      %v566 = vmul.f32 %v558, %v562
      %v567 = vmul.f32 %v559, %v563
      %568 = vst [vmem:[#allocation2 + $0x70] sm:$0xff] %v566
      %569 = vst [vmem:[#allocation2 + $0x78] sm:$0xff] %v567
      %570 = vrot.lane.b32.xlu0 %v460, 112
      %v571 = vpop.permute.xlu0 %570
      %572 = vrot.lane.b32.xlu0 %v461, 112
      %v573 = vpop.permute.xlu0 %572
      %v574 = vsel %vm367, %v571, %v573
      %v575 = vsel %vm367, %v573, %v571
      %v576 = vld [vmem:[%s370] ss:$8 sm:$0x3]
      %v578 = vperm.slane %v576, 0
      %v579 = vperm.slane %v576, 1
      %v582 = vmul.f32 %v574, %v578
      %v583 = vmul.f32 %v575, %v579
      %584 = vst [vmem:[#allocation2 + $0x80] sm:$0xff] %v582
      %585 = vst [vmem:[#allocation2 + $0x88] sm:$0xff] %v583
      %586 = vrot.lane.b32.xlu0 %v460, 111
      %v587 = vpop.permute.xlu0 %586
      %588 = vrot.lane.b32.xlu0 %v461, 111
      %v589 = vpop.permute.xlu0 %588
      %v590 = vsel %vm385, %v587, %v589
      %v591 = vsel %vm385, %v589, %v587
      %v592 = vld [vmem:[%s388] ss:$8 sm:$0x3]
      %v594 = vperm.slane %v592, 0
      %v595 = vperm.slane %v592, 1
      %v598 = vmul.f32 %v590, %v594
      %v599 = vmul.f32 %v591, %v595
      %600 = vst [vmem:[#allocation2 + $0x90] sm:$0xff] %v598
      %601 = vst [vmem:[#allocation2 + $0x98] sm:$0xff] %v599
      %v602 = vld [vmem:[%s3] sm:$0xf]
      %v603 = vld [vmem:[#allocation2] sm:$0xff]
      %v604 = vld [vmem:[#allocation2 + $0x8] sm:$0xff]
      %v605 = vld [vmem:[#allocation2 + $0x10] sm:$0xff]
      %v606 = vld [vmem:[#allocation2 + $0x18] sm:$0xff]
      %v607 = vld [vmem:[#allocation2 + $0x20] sm:$0xff]
      %v608 = vld [vmem:[#allocation2 + $0x28] sm:$0xff]
      %v609 = vld [vmem:[#allocation2 + $0x30] sm:$0xff]
      %v610 = vld [vmem:[#allocation2 + $0x38] sm:$0xff]
      %v611 = vld [vmem:[#allocation2 + $0x40] sm:$0xff]
      %v612 = vld [vmem:[#allocation2 + $0x48] sm:$0xff]
      %v613 = vld [vmem:[#allocation2 + $0x50] sm:$0xff]
      %v614 = vld [vmem:[#allocation2 + $0x58] sm:$0xff]
      %v615 = vld [vmem:[#allocation2 + $0x60] sm:$0xff]
      %v616 = vld [vmem:[#allocation2 + $0x68] sm:$0xff]
      %v617 = vld [vmem:[#allocation2 + $0x70] sm:$0xff]
      %v618 = vld [vmem:[#allocation2 + $0x78] sm:$0xff]
      %v619 = vld [vmem:[#allocation2 + $0x80] sm:$0xff]
      %v620 = vld [vmem:[#allocation2 + $0x88] sm:$0xff]
      %v621 = vld [vmem:[#allocation2 + $0x90] sm:$0xff]
      %v622 = vld [vmem:[#allocation2 + $0x98] sm:$0xff]
      %v623 = vpack.c.bf16 %v605, %v603
      %v624 = vpack.c.bf16 %v606, %v604
      %v625 = vpack.c.bf16 %v609, %v607
      %v626 = vpack.c.bf16 %v610, %v608
      %v627 = vpack.c.bf16 %v613, %v611
      %v628 = vpack.c.bf16 %v614, %v612
      %v629 = vpack.c.bf16 %v617, %v615
      %v630 = vpack.c.bf16 %v618, %v616
      %v631 = vpack.c.bf16 %v621, %v619
      %v632 = vpack.c.bf16 %v622, %v620
      %v634 = vsel %vm430, %v602, 0
      %636 = vmatpush.bf16.msra.mxu0 0
      %637 = vmatpush.bf16.msra.mxu0 0
      %638 = vmatpush.bf16.msra.mxu0 0
      %639 = vmatpush.bf16.msra.mxu0 %v631
      %640 = vmatpush.bf16.msra.mxu0 %v629
      %641 = vmatpush.bf16.msra.mxu0 %v627
      %642 = vmatpush.bf16.msra.mxu0 %v625
      %643 = vmatpush.bf16.msra.mxu0 %v623
      %644 = vmatmul.bf16.gmra.mxu0 %v634
      %v645 = vpop.f32.mrf.mxu0
      %v646 = vadd.f32 0.0, %v645
      %v647 = vpop.f32.mrf.mxu0
      %648 = vdwg.mxu0
      %649 = vmatpush.bf16.msra.mxu0 0
      %650 = vmatpush.bf16.msra.mxu0 0
      %651 = vmatpush.bf16.msra.mxu0 0
      %652 = vmatpush.bf16.msra.mxu0 %v632
      %653 = vmatpush.bf16.msra.mxu0 %v630
      %654 = vmatpush.bf16.msra.mxu0 %v628
      %655 = vmatpush.bf16.msra.mxu0 %v626
      %656 = vmatpush.bf16.msra.mxu0 %v624
      %657 = vmatmul.bf16.gmra.mxu0 %v634
      %v658 = vpop.f32.mrf.mxu0
      %v659 = vadd.f32 0.0, %v658
      %v660 = vpop.f32.mrf.mxu0
      %661 = vdwg.mxu0
      %662 = vst [vmem:[%s237] sm:$0xff] %v646
      %663 = vst [vmem:[%s237 + $0x8] sm:$0xff] %v659
      %p664 = scmp.lt.s32.totalorder %s17, 1
      %s665 = scalar_select %p664, %s17, 1
      %s666 = smul.addr %s665, 2
      %s667 = smul.addr %s666, 8
      %s668 = scalar_lea.vmem %s4, %s667
      %p669 = scmp.lt.s32.totalorder %s17, 1
      %s670 = scalar_select %p669, %s17, 1
      %s671 = smul.addr %s670, 2
      %s672 = smul.addr %s671, 8
      %s673 = scalar_lea.vmem %s5, %s672
      // Predicated region
      $region37: #{fused_conv1_conv2.1} parent=35 // pred_check
        %p674 = pneg %p124
      $region38: #{fused_conv1_conv2.1} parent=35 // pred_check_branch
        %676 = sbr.rel (%p674) target = $region40
      $region39: #{fused_conv1_conv2.1} parent=35 // pred_region
        _
      $region40: #{fused_conv1_conv2.1} parent=35 // pred_fallthru
        _
      // Predicated region
      $region41: #{fused_conv1_conv2.1} parent=35 // pred_check
        %p677 = pneg %p150
      $region42: #{fused_conv1_conv2.1} parent=35 // pred_check_branch
        %679 = sbr.rel (%p677) target = $region44
      $region43: #{fused_conv1_conv2.1} parent=35 // pred_region
        _
      $region44: #{fused_conv1_conv2.1} parent=35 // pred_fallthru
        _
    $region36: #{fused_conv1_conv2.1} parent=5 // pred_fallthru
      _
    %p680 = scmp.le.s32.totalorder 2, %s12
    // Predicated region
    $region45: #{fused_conv1_conv2.1} parent=5 // pred_check
      %p681 = pneg %p680
    $region46: #{fused_conv1_conv2.1} parent=5 // pred_check_branch
      %683 = sbr.rel (%p681) target = $region48
    $region47: #{fused_conv1_conv2.1} parent=5 // pred_region
      %s684 = ssub.s32 %s12, 2
      // Predicated region
      $region49: #{fused_conv1_conv2.1} parent=47 // pred_check
        %p685 = pneg %p130
      $region50: #{fused_conv1_conv2.1} parent=47 // pred_check_branch
        %687 = sbr.rel (%p685) target = $region52
      $region51: #{fused_conv1_conv2.1} parent=47 // pred_region
        %p688 = scmp.lt.s32.totalorder %s18, 1
        %s689 = scalar_select %p688, %s18, 1
        %s690 = smul.addr %s689, 2
        %s691 = smul.addr %s690, 8
        %s692 = scalar_lea.vmem %s4, %s691
      $region52: #{fused_conv1_conv2.1} parent=47 // pred_fallthru
        _
      // Predicated region
      $region53: #{fused_conv1_conv2.1} parent=47 // pred_check
        %p693 = pneg %p156
      $region54: #{fused_conv1_conv2.1} parent=47 // pred_check_branch
        %695 = sbr.rel (%p693) target = $region56
      $region55: #{fused_conv1_conv2.1} parent=47 // pred_region
        %p696 = scmp.lt.s32.totalorder %s18, 1
        %s697 = scalar_select %p696, %s18, 1
        %s698 = smul.addr %s697, 2
        %s699 = smul.addr %s698, 8
        %s700 = scalar_lea.vmem %s5, %s699
      $region56: #{fused_conv1_conv2.1} parent=47 // pred_fallthru
        _
    $region48: #{fused_conv1_conv2.1} parent=5 // pred_fallthru
      _
  $region6: #{fused_conv1_conv2.1} parent=0 // loop_footer
    %s16 = sadd.s32 1, %s12
  $region7: #{fused_conv1_conv2.1} parent=0 // loop_footer_branch
    %11 = sbr.rel target = $region3
  $region8: #{fused_conv1_conv2.1} parent=0 // loop_exit
    _

</llo_original>
